<compile_context>
chip_gen: v7x
topology: tpu7x:2x2x1
jax: 0.10.0
libtpu: 0.0.40
codegen_flags: <defaults>
</compile_context>

<pallas_src>
import functools
import math

import jax
import jax.numpy as jnp
from jax.experimental import pallas as pl
from jax.experimental.pallas import tpu as pltpu


# ----------------------------------------------------------------------------
# Kernels
# ----------------------------------------------------------------------------
def _softmax_kernel(x_ref, o_ref, *, inv_temp):
    """Plain softmax over the lane axis (one softmax row per block row)."""
    x = x_ref[...].astype(jnp.float32) * inv_temp
    m = jnp.max(x, axis=-1, keepdims=True)
    e = jnp.exp(x - m)
    s = jnp.sum(e, axis=-1, keepdims=True)
    inv = pl.reciprocal(s, approx=True)
    inv = inv * (2.0 - s * inv)               # one Newton step -> ~f32 exact
    o_ref[...] = (e * inv).astype(o_ref.dtype)


def _softmax_packed_kernel(x_ref, blk_ref, shf_ref, o_ref, *, inv_temp, nshift):
    """k softmax rows of length C packed into each lane-dense row of Cp=k*C.

    All per-element work stays on the lane-dense (tile, Cp) view; segmented
    reductions go through the MXU (idle otherwise):
      * per-segment max: butterfly of in-segment cyclic shifts implemented as
        bf16 permutation matmuls (exact for bf16-rounded values -> the max is
        bit-identical across all lanes of a segment and cancels exactly),
      * per-segment sum + broadcast: one block-diagonal ones matmul.
    """
    x = x_ref[...].astype(jnp.float32) * inv_temp          # (tile, Cp)

    # ---- segmented max (numerical stabilizer), lane-dense butterfly --------
    m = x.astype(jnp.bfloat16).astype(jnp.float32)         # bf16-rounded copy
    for i in range(nshift):
        shifted = jax.lax.dot_general(
            m.astype(jnp.bfloat16), shf_ref[i],
            (((1,), (0,)), ((), ())),
            preferred_element_type=jnp.float32)
        m = jnp.maximum(m, shifted)
    # m is constant within each C-segment, so it cancels exactly below; its
    # bf16 rounding only matters for overflow safety (|x|/T ~ 1e4+ territory).
    e = jnp.exp(x - m)

    # ---- segmented sum (+ broadcast) via block-diagonal ones matmul --------
    s = jax.lax.dot_general(
        e, blk_ref[...],
        (((1,), (0,)), ((), ())),
        precision=jax.lax.Precision.HIGHEST,
        preferred_element_type=jnp.float32)

    inv = pl.reciprocal(s, approx=True)
    inv = inv * (2.0 - s * inv)               # one Newton step -> ~f32 exact
    o_ref[...] = (e * inv).astype(o_ref.dtype)


# ----------------------------------------------------------------------------
# Wrapper
# ----------------------------------------------------------------------------
def _choose_tile(rows_p, Cp, itemsize):
    """Row-tile: dtype-aware sublane alignment, ~2 MiB blocks, >=4 grid steps."""
    sub = 8 * max(1, 4 // max(1, itemsize))   # 8 (f32), 16 (bf16/f16), 32 (i8)
    if rows_p <= sub:
        return rows_p                          # single full-extent block
    block_budget = 2 * 1024 * 1024             # ~2 MiB of input bytes / block
    budget_tile = max(sub, (block_budget // (Cp * itemsize)) // sub * sub)
    quarter = ((rows_p + 3) // 4 + sub - 1) // sub * sub   # >= rows_p/4
    return max(sub, min(budget_tile, quarter))


def soft_argmax(x, temperature=0.5, sampling=False, seed=0, eps=1e-20):
    """Pallas TPU implementation of SoftArgmax.forward."""
    orig_shape = x.shape
    C = int(orig_shape[-1])
    rows = 1
    for d in orig_shape[:-1]:
        rows *= int(d)

    if sampling:
        # TODO(synk): fused on-chip Gumbel sampling (pltpu.prng_seed /
        # prng_random_bits) has no interpret/CPU lowering; the noise is
        # generated with jax.random here (same formula as the PyTorch module,
        # but not torch's RNG stream).
        key = jax.random.PRNGKey(seed)
        u = jax.random.uniform(key, orig_shape, dtype=jnp.float32)
        gumbel = -jnp.log(-jnp.log(u + eps) + eps)
        x = (x.astype(jnp.float32) + gumbel).astype(x.dtype)

    if C == 1:                                  # softmax of a single element
        return jnp.ones(orig_shape, dtype=x.dtype)

    # ---- lane packing: k rows of length C -> one lane-dense row of Cp ------
    k = 1
    if C < 128:
        kmin = 128 // math.gcd(C, 128)          # smallest k with k*C % 128 == 0
        if kmin > 1 and rows % kmin == 0 and kmin * C <= 512:
            k = kmin
    Cp = k * C
    rows_p = rows // k
    x2 = x.reshape(rows_p, Cp)                  # contiguous -> free reshape

    itemsize = jnp.dtype(x.dtype).itemsize
    tile = _choose_tile(rows_p, Cp, itemsize)
    grid = pl.cdiv(rows_p, tile)                # ragged tail masked by Pallas

    inv_temp = float(1.0 / temperature)
    compiler_params = pltpu.CompilerParams(
        dimension_semantics=("parallel",),
        vmem_limit_bytes=48 * 1024 * 1024)

    if k == 1:
        kernel = functools.partial(_softmax_kernel, inv_temp=inv_temp)
        cost = pl.CostEstimate(flops=8 * rows * C, transcendentals=2 * rows * C,
                               bytes_accessed=2 * rows * C * itemsize)
        out2 = pl.pallas_call(
            kernel,
            out_shape=jax.ShapeDtypeStruct((rows_p, Cp), x.dtype),
            grid=(grid,),
            in_specs=[pl.BlockSpec((tile, Cp), lambda i: (i, 0))],
            out_specs=pl.BlockSpec((tile, Cp), lambda i: (i, 0)),
            compiler_params=compiler_params,
            cost_estimate=cost,
        )(x2)
        return out2.reshape(orig_shape)

    # ---- packed path: constant matrices for the segmented reductions -------
    nshift = max(1, (C - 1).bit_length())       # ceil(log2(C)) butterfly steps
    lane = jnp.arange(Cp, dtype=jnp.int32)
    seg = lane // C
    pos = lane % C
    blk = (seg[:, None] == seg[None, :]).astype(jnp.float32)        # (Cp, Cp)
    shift_list = []
    for t in range(nshift):
        s = 1 << t
        src = seg * C + (pos + s) % C           # column j reads lane src[j]
        shift_list.append((lane[:, None] == src[None, :]).astype(jnp.bfloat16))
    shf = jnp.stack(shift_list)                 # (nshift, Cp, Cp)

    kernel = functools.partial(_softmax_packed_kernel,
                               inv_temp=inv_temp, nshift=nshift)
    cost = pl.CostEstimate(
        flops=rows * C * (8 + 2 * Cp * (nshift + 1)),
        transcendentals=2 * rows * C,
        bytes_accessed=2 * rows * C * itemsize)
    out2 = pl.pallas_call(
        kernel,
        out_shape=jax.ShapeDtypeStruct((rows_p, Cp), x.dtype),
        grid=(grid,),
        in_specs=[
            pl.BlockSpec((tile, Cp), lambda i: (i, 0)),
            pl.BlockSpec((Cp, Cp), lambda i: (0, 0)),            # fetched once
            pl.BlockSpec((nshift, Cp, Cp), lambda i: (0, 0, 0)),  # fetched once
        ],
        out_specs=pl.BlockSpec((tile, Cp), lambda i: (i, 0)),
        compiler_params=compiler_params,
        cost_estimate=cost,
    )(x2, blk, shf)
    return out2.reshape(orig_shape)


def _reference(x, temperature=0.5):
    return jax.nn.softmax(x.astype(jnp.float32) / temperature, axis=-1).astype(x.dtype)


if __name__ == "__main__":
    key = jax.random.PRNGKey(0)
    # NCHW-style input; softmax taken over the last (W) axis, as in the module.
    x = jax.random.normal(key, (2, 4, 16, 16), dtype=jnp.float32)

    # 1) deterministic lane-packed path (C=16 -> k=8, Cp=128)
    out = jax.block_until_ready(soft_argmax(x, temperature=0.5))
    assert out.shape == x.shape
    assert jnp.allclose(out, _reference(x, 0.5), atol=2e-5, rtol=2e-5), \
        "mismatch vs reference (packed path)"

    # 2) wide-C, non-packed path with a ragged row tail (rows=20, tile=8)
    x2 = jax.random.normal(jax.random.PRNGKey(1), (4, 5, 256), dtype=jnp.float32)
    out2 = jax.block_until_ready(soft_argmax(x2, temperature=0.5))
    assert jnp.allclose(out2, _reference(x2, 0.5), atol=2e-5, rtol=2e-5), \
        "mismatch vs reference (wide-C / ragged path)"

    # 3) non-power-of-two small C (C=48 -> k=8, Cp=384): lcm packing path
    x3 = jax.random.normal(jax.random.PRNGKey(2), (4, 8, 48), dtype=jnp.float32)
    out3 = jax.block_until_ready(soft_argmax(x3, temperature=0.5))
    assert jnp.allclose(out3, _reference(x3, 0.5), atol=2e-5, rtol=2e-5), \
        "mismatch vs reference (non-power-of-two packed path)"

    # 4) sampling path: reproduce the wrapper's Gumbel noise and compare.
    seed = 42
    u = jax.random.uniform(jax.random.PRNGKey(seed), x.shape, dtype=jnp.float32)
    gumbel = -jnp.log(-jnp.log(u + 1e-20) + 1e-20)
    out_s = jax.block_until_ready(
        soft_argmax(x, temperature=0.5, sampling=True, seed=seed))
    assert out_s.shape == x.shape
    assert bool(jnp.all(jnp.isfinite(out_s)))
    assert jnp.allclose(out_s, _reference(x + gumbel, 0.5), atol=2e-5, rtol=2e-5), \
        "mismatch vs reference (sampling path)"

    print("KERNEL_OK")
</pallas_src>

<mosaic_0001>
module attributes {stable_mosaic.version = 11 : i64} {
  func.func @_softmax_packed_kernel(%arg0: i32, %arg1: memref<8x128xf32, #tpu.memory_space<vmem>>, %arg2: memref<128x128xf32, #tpu.memory_space<vmem>>, %arg3: memref<4x128x128xbf16, #tpu.memory_space<vmem>>, %arg4: memref<8x128xf32, #tpu.memory_space<vmem>>) attributes {dimension_semantics = [#tpu.dimension_semantics<parallel>], iteration_bounds = array<i64: 2>, scalar_prefetch = 0 : i64, scratch_operands = 0 : i64, tpu.core_type = #tpu.core_type<tc>, window_params = [{transform_indices = @transform_0, window_bounds = array<i64: 8, 128>}, {pipeline_mode = #tpu.pipeline_mode<synchronous>, transform_indices = @transform_1, window_bounds = array<i64: 128, 128>}, {pipeline_mode = #tpu.pipeline_mode<synchronous>, transform_indices = @transform_2, window_bounds = array<i64: 4, 128, 128>}, {transform_indices = @transform_3, window_bounds = array<i64: 8, 128>}]} {
    %c0 = arith.constant 0 : index
    %c0_0 = arith.constant 0 : index
    %0 = vector.load %arg1[%c0, %c0_0] : memref<8x128xf32, #tpu.memory_space<vmem>>, vector<8x128xf32>
    %cst = arith.constant 2.000000e+00 : f32
    %1 = vector.broadcast %cst : f32 to vector<8x128xf32>
    %2 = arith.mulf %0, %1 : vector<8x128xf32>
    %3 = arith.truncf %2 : vector<8x128xf32> to vector<8x128xbf16>
    %4 = arith.extf %3 : vector<8x128xbf16> to vector<8x128xf32>
    %5 = arith.truncf %4 : vector<8x128xf32> to vector<8x128xbf16>
    %c0_1 = arith.constant 0 : index
    %c0_2 = arith.constant 0 : index
    %c0_3 = arith.constant 0 : index
    %6 = vector.load %arg3[%c0_1, %c0_2, %c0_3] : memref<4x128x128xbf16, #tpu.memory_space<vmem>>, vector<1x128x128xbf16>
    %7 = vector.shape_cast %6 : vector<1x128x128xbf16> to vector<128x128xbf16>
    %cst_4 = arith.constant dense<0.000000e+00> : vector<8x128xf32>
    %8 = tpu.matmul %5, %7, %cst_4 {dimension_numbers = #tpu.dot_dimension_numbers<[1], [0], [0], [1], [0, 0, 1, 1], [], []>} : vector<8x128xbf16>, vector<128x128xbf16>, vector<8x128xf32> -> vector<8x128xf32>
    %9 = arith.maximumf %4, %8 : vector<8x128xf32>
    %10 = arith.truncf %9 : vector<8x128xf32> to vector<8x128xbf16>
    %c1 = arith.constant 1 : index
    %c0_5 = arith.constant 0 : index
    %c0_6 = arith.constant 0 : index
    %11 = vector.load %arg3[%c1, %c0_5, %c0_6] : memref<4x128x128xbf16, #tpu.memory_space<vmem>>, vector<1x128x128xbf16>
    %12 = vector.shape_cast %11 : vector<1x128x128xbf16> to vector<128x128xbf16>
    %cst_7 = arith.constant dense<0.000000e+00> : vector<8x128xf32>
    %13 = tpu.matmul %10, %12, %cst_7 {dimension_numbers = #tpu.dot_dimension_numbers<[1], [0], [0], [1], [0, 0, 1, 1], [], []>} : vector<8x128xbf16>, vector<128x128xbf16>, vector<8x128xf32> -> vector<8x128xf32>
    %14 = arith.maximumf %9, %13 : vector<8x128xf32>
    %15 = arith.truncf %14 : vector<8x128xf32> to vector<8x128xbf16>
    %c2 = arith.constant 2 : index
    %c0_8 = arith.constant 0 : index
    %c0_9 = arith.constant 0 : index
    %16 = vector.load %arg3[%c2, %c0_8, %c0_9] : memref<4x128x128xbf16, #tpu.memory_space<vmem>>, vector<1x128x128xbf16>
    %17 = vector.shape_cast %16 : vector<1x128x128xbf16> to vector<128x128xbf16>
    %cst_10 = arith.constant dense<0.000000e+00> : vector<8x128xf32>
    %18 = tpu.matmul %15, %17, %cst_10 {dimension_numbers = #tpu.dot_dimension_numbers<[1], [0], [0], [1], [0, 0, 1, 1], [], []>} : vector<8x128xbf16>, vector<128x128xbf16>, vector<8x128xf32> -> vector<8x128xf32>
    %19 = arith.maximumf %14, %18 : vector<8x128xf32>
    %20 = arith.truncf %19 : vector<8x128xf32> to vector<8x128xbf16>
    %c3 = arith.constant 3 : index
    %c0_11 = arith.constant 0 : index
    %c0_12 = arith.constant 0 : index
    %21 = vector.load %arg3[%c3, %c0_11, %c0_12] : memref<4x128x128xbf16, #tpu.memory_space<vmem>>, vector<1x128x128xbf16>
    %22 = vector.shape_cast %21 : vector<1x128x128xbf16> to vector<128x128xbf16>
    %cst_13 = arith.constant dense<0.000000e+00> : vector<8x128xf32>
    %23 = tpu.matmul %20, %22, %cst_13 {dimension_numbers = #tpu.dot_dimension_numbers<[1], [0], [0], [1], [0, 0, 1, 1], [], []>} : vector<8x128xbf16>, vector<128x128xbf16>, vector<8x128xf32> -> vector<8x128xf32>
    %24 = arith.maximumf %19, %23 : vector<8x128xf32>
    %25 = arith.subf %2, %24 : vector<8x128xf32>
    %26 = math.exp %25 : vector<8x128xf32>
    %c0_14 = arith.constant 0 : index
    %c0_15 = arith.constant 0 : index
    %27 = vector.load %arg2[%c0_14, %c0_15] : memref<128x128xf32, #tpu.memory_space<vmem>>, vector<128x128xf32>
    %cst_16 = arith.constant dense<0.000000e+00> : vector<8x128xf32>
    %28 = tpu.matmul %26, %27, %cst_16 {dimension_numbers = #tpu.dot_dimension_numbers<[1], [0], [0], [1], [0, 0, 1, 1], [], []>, precision = #tpu.contract_precision<fp32>} : vector<8x128xf32>, vector<128x128xf32>, vector<8x128xf32> -> vector<8x128xf32>
    %29 = tpu.reciprocal %28 {approx = true} : vector<8x128xf32> -> vector<8x128xf32>
    %30 = arith.mulf %28, %29 : vector<8x128xf32>
    %cst_17 = arith.constant 2.000000e+00 : f32
    %31 = vector.broadcast %cst_17 : f32 to vector<8x128xf32>
    %32 = arith.subf %31, %30 : vector<8x128xf32>
    %33 = arith.mulf %29, %32 : vector<8x128xf32>
    %34 = arith.mulf %26, %33 : vector<8x128xf32>
    %c0_18 = arith.constant 0 : index
    %c0_19 = arith.constant 0 : index
    %35 = vector.load %arg4[%c0_18, %c0_19] : memref<8x128xf32, #tpu.memory_space<vmem>>, vector<8x128xf32>
    tpu.vector_store %arg4[%c0_18, %c0_19], %34 {strides = array<i32>} : memref<8x128xf32, #tpu.memory_space<vmem>>, vector<8x128xf32>,
    return
  }
  func.func @transform_0(%arg0: i32) -> (i32, i32) {
    %c0_i32 = arith.constant 0 : i32
    %c0_i32_0 = arith.constant 0 : i32
    return %arg0, %c0_i32 : i32, i32
  }
  func.func @transform_1(%arg0: i32) -> (i32, i32) {
    %c0_i32 = arith.constant 0 : i32
    %c0_i32_0 = arith.constant 0 : i32
    %c0_i32_1 = arith.constant 0 : i32
    return %c0_i32, %c0_i32_0 : i32, i32
  }
  func.func @transform_2(%arg0: i32) -> (i32, i32, i32) {
    %c0_i32 = arith.constant 0 : i32
    %c0_i32_0 = arith.constant 0 : i32
    %c0_i32_1 = arith.constant 0 : i32
    %c0_i32_2 = arith.constant 0 : i32
    return %c0_i32, %c0_i32_0, %c0_i32_1 : i32, i32, i32
  }
  func.func @transform_3(%arg0: i32) -> (i32, i32) {
    %c0_i32 = arith.constant 0 : i32
    %c0_i32_0 = arith.constant 0 : i32
    return %arg0, %c0_i32 : i32, i32
  }
}

</mosaic_0001>

<llo_original>
// kernel: tpu_custom_call.1
$region0: #{tpu_custom_call.1}
  #allocation0 [shape = 'u32[]', space=smem, size = 0x4, offset = 0x4, fixed_abs, tag = 'smem constant byte address 0x4 - core index']
  #allocation1 [shape = 'u32[144,128]{1,0:T(1,128)}', space=vmem, size = 0x12000, scoped, tag = 'internal scratch']
  %s0 = inlined_call_operand.hbm [shape: f32[16,128], index: 0, kind: input, shape index: {}]
  %s1 = inlined_call_operand.hbm [shape: f32[128,128], index: 1, kind: input, shape index: {}]
  %s2 = inlined_call_operand.hbm [shape: bf16[4,128,128], index: 2, kind: input, shape index: {}]
  %s3 = inlined_call_operand.hbm [shape: f32[16,128], index: 3, kind: output, shape index: {}]
  %s4 = sld [smem:[#allocation0]]
  $region57: #{tpu_custom_call.1} parent=0
    _
  %s6 = ssub.s32 1, %s4
  %s7 = scalar_select 0, %s6, %s4
  $region1: #{tpu_custom_call.1} parent=0
    #allocation2 [shape = 'u8[8192]{0}', space=vmem, size = 0x2000, scoped, tag = 'input window, operand 0']
    #allocation3 [shape = 's32[2]{0}', space=sflag, size = 0x8, scoped, tag = 'scoped memory for tpu_custom_call.1']
    #allocation4 [shape = 's32[2]{0}', space=sflag, size = 0x8, scoped, tag = 'scoped memory for tpu_custom_call.1']
    #allocation5 [shape = 'u8[65536]{0}', space=vmem, size = 0x10000, scoped, tag = 'input window, operand 1, single buffered']
    #allocation6 [shape = 's32[1]{0}', space=sflag, size = 0x4, scoped, tag = 'scoped memory for tpu_custom_call.1']
    #allocation7 [shape = 'u8[131072]{0}', space=vmem, size = 0x20000, scoped, tag = 'input window, operand 2, single buffered']
    #allocation8 [shape = 'u8[8192]{0}', space=vmem, size = 0x2000, scoped, tag = 'output window, operand 0']
    %8 = vsyncpa [#allocation3], 0
    %s9 = scalar_lea.sflag [#allocation3], 1
    %10 = vsyncpa %s9, 0
    %11 = vsyncpa [#allocation6], 0
    %12 = vsyncpa [#allocation4], 0
    %s13 = scalar_lea.sflag [#allocation4], 1
    %14 = vsyncpa %s13, 0
    loop: start=0, step=1, limit=4
    $region2: #{tpu_custom_call.1} parent=1 // loop_pre_header
      _
    $region3: #{tpu_custom_call.1} parent=1 // loop_header
      %s16 = sphi 0, %s20
      %p17 = scmp.ge.s32.totalorder %s16, 4
      %s26 = sphi 0, %s28
      %s29 = sphi 0, %s26
      %s30 = sphi 0, %s29
      %s46 = sphi 0, %s30
      %s50 = sphi 0, %s50
      %s52 = sphi 0, %s50
      %s53 = sphi 0, %s52
      %s67 = sphi 0, %s53
      %s71 = sphi 0, %s71
      %s73 = sphi 0, %s71
      %s74 = sphi 0, %s73
      %s88 = sphi 0, %s74
      %s94 = sphi 0, %s96
      %s97 = sphi 0, %s94
      %s98 = sphi 0, %s97
      %s114 = sphi 0, %s98
    $region4: #{tpu_custom_call.1} parent=1 // loop_header_branch
      %19 = sbr.rel (%p17) target = $region8
    $region5: #{tpu_custom_call.1} parent=1 // loop_body
      %s21 = ssub.s32 %s16, 1
      %s22 = ssub.s32 %s16, 2
      %s23 = sadd.s32 %s16, 1
      %s24 = ssub.s32 %s16, %s23
      %p25 = scmp.eq.s32.totalorder %s24, 0
      %s27 = sadd.s32 %s26, 1
      %s28 = scalar_select %p25, %s26, %s27
      %p31 = pneg %p25
      %p32 = scmp.eq.s32.totalorder %s16, 1
      %p33 = por %p31, %p32
      %p34 = scmp.ne.s32.totalorder %s26, %s29
      %p35 = scmp.eq.s32.totalorder %s16, 0
      %p36 = por %p34, %p35
      %p37 = scmp.ne.s32.totalorder %s26, %s29
      %p38 = scmp.eq.s32.totalorder %s21, 1
      %p39 = por %p37, %p38
      %p40 = scmp.ne.s32.totalorder %s29, %s30
      %p41 = scmp.eq.s32.totalorder %s21, 0
      %p42 = por %p40, %p41
      %p43 = scmp.ne.s32.totalorder %s29, %s30
      %p44 = scmp.eq.s32.totalorder %s22, 1
      %p45 = por %p43, %p44
      %p47 = scmp.ne.s32.totalorder %s30, %s46
      %p48 = scmp.eq.s32.totalorder %s22, 0
      %p49 = por %p47, %p48
      %s51 = sadd.s32 %s50, 1
      %p54 = scmp.eq.s32.totalorder %s16, 1
      %p55 = scmp.ne.s32.totalorder %s50, %s52
      %p56 = scmp.eq.s32.totalorder %s16, 0
      %p57 = por %p55, %p56
      %p58 = scmp.ne.s32.totalorder %s50, %s52
      %p59 = scmp.eq.s32.totalorder %s21, 1
      %p60 = por %p58, %p59
      %p61 = scmp.ne.s32.totalorder %s52, %s53
      %p62 = scmp.eq.s32.totalorder %s21, 0
      %p63 = por %p61, %p62
      %p64 = scmp.ne.s32.totalorder %s52, %s53
      %p65 = scmp.eq.s32.totalorder %s22, 1
      %p66 = por %p64, %p65
      %p68 = scmp.ne.s32.totalorder %s53, %s67
      %p69 = scmp.eq.s32.totalorder %s22, 0
      %p70 = por %p68, %p69
      %s72 = sadd.s32 %s71, 1
      %p75 = scmp.eq.s32.totalorder %s16, 1
      %p76 = scmp.ne.s32.totalorder %s71, %s73
      %p77 = scmp.eq.s32.totalorder %s16, 0
      %p78 = por %p76, %p77
      %p79 = scmp.ne.s32.totalorder %s71, %s73
      %p80 = scmp.eq.s32.totalorder %s21, 1
      %p81 = por %p79, %p80
      %p82 = scmp.ne.s32.totalorder %s73, %s74
      %p83 = scmp.eq.s32.totalorder %s21, 0
      %p84 = por %p82, %p83
      %p85 = scmp.ne.s32.totalorder %s73, %s74
      %p86 = scmp.eq.s32.totalorder %s22, 1
      %p87 = por %p85, %p86
      %p89 = scmp.ne.s32.totalorder %s74, %s88
      %p90 = scmp.eq.s32.totalorder %s22, 0
      %p91 = por %p89, %p90
      %s92 = ssub.s32 %s16, %s23
      %p93 = scmp.eq.s32.totalorder %s92, 0
      %s95 = sadd.s32 %s94, 1
      %s96 = scalar_select %p93, %s94, %s95
      %p99 = pneg %p93
      %p100 = scmp.eq.s32.totalorder %s16, 1
      %p101 = por %p99, %p100
      %p102 = scmp.ne.s32.totalorder %s94, %s97
      %p103 = scmp.eq.s32.totalorder %s16, 0
      %p104 = por %p102, %p103
      %p105 = scmp.ne.s32.totalorder %s94, %s97
      %p106 = scmp.eq.s32.totalorder %s21, 1
      %p107 = por %p105, %p106
      %p108 = scmp.ne.s32.totalorder %s97, %s98
      %p109 = scmp.eq.s32.totalorder %s21, 0
      %p110 = por %p108, %p109
      %p111 = scmp.ne.s32.totalorder %s97, %s98
      %p112 = scmp.eq.s32.totalorder %s22, 1
      %p113 = por %p111, %p112
      %p115 = scmp.ne.s32.totalorder %s98, %s114
      %p116 = scmp.eq.s32.totalorder %s22, 0
      %p117 = por %p115, %p116
      %p118 = scmp.le.s32.totalorder 1, %s16
      %p119 = scmp.lt.s32.totalorder %s16, 3
      %p120 = pnand %p118, %p119
      %p121 = pneg %p120
      // Predicated region
      $region9: #{tpu_custom_call.1} parent=5 // pred_check
        _
      $region10: #{tpu_custom_call.1} parent=5 // pred_check_branch
        %123 = sbr.rel (%p120) target = $region12
      $region11: #{tpu_custom_call.1} parent=5 // pred_region
        %s124 = ssub.s32 %s16, 1
        // Predicated region
        $region13: #{tpu_custom_call.1} parent=11 // pred_check
          %p125 = pneg %p63
        $region14: #{tpu_custom_call.1} parent=11 // pred_check_branch
          %127 = sbr.rel (%p125) target = $region16
        $region15: #{tpu_custom_call.1} parent=11 // pred_region
          %s129 = ssub.s32 2048, 2048
          %130 = vsyncadd [#allocation6], %s129
          %s131 = sshll.u32 [#allocation5], 4
          %s132 = int_to_ptr.vmem [resolvable:$true] %s131
          %137 = dma.hbm_to_vmem [thread:$0]  %s1, 2048, %s132, [#allocation6], 128, 128, 8
        $region16: #{tpu_custom_call.1} parent=11 // pred_fallthru
          _
        // Predicated region
        $region17: #{tpu_custom_call.1} parent=11 // pred_check
          %p138 = pneg %p84
        $region18: #{tpu_custom_call.1} parent=11 // pred_check_branch
          %140 = sbr.rel (%p138) target = $region20
        $region19: #{tpu_custom_call.1} parent=11 // pred_region
          %s142 = ssub.s32 4096, 4096
          %143 = vsyncadd [#allocation6], %s142
          %s144 = sshll.u32 [#allocation7], 4
          %s145 = int_to_ptr.vmem [resolvable:$true] %s144
          %150 = dma.hbm_to_vmem [thread:$0]  %s2, 4096, %s145, [#allocation6], 64, 64, 4
        $region20: #{tpu_custom_call.1} parent=11 // pred_fallthru
          _
      $region12: #{tpu_custom_call.1} parent=5 // pred_fallthru
        _
      %p151 = scmp.lt.s32.totalorder %s16, 2
      // Predicated region
      $region21: #{tpu_custom_call.1} parent=5 // pred_check
        %p152 = pneg %p151
      $region22: #{tpu_custom_call.1} parent=5 // pred_check_branch
        %154 = sbr.rel (%p152) target = $region24
      $region23: #{tpu_custom_call.1} parent=5 // pred_region
        // Predicated region
        $region25: #{tpu_custom_call.1} parent=23 // pred_check
          %p155 = pneg %p36
        $region26: #{tpu_custom_call.1} parent=23 // pred_check_branch
          %157 = sbr.rel (%p155) target = $region28
        $region27: #{tpu_custom_call.1} parent=23 // pred_region
          %s158 = sand.u32 %s26, 1
          %s159 = scalar_lea.sflag [#allocation3], %s158
          %s160 = sand.u32 %s26, 1
          %s161 = smul.addr %s160, 8
          %s162 = scalar_lea.vmem [#allocation2], %s161
          %s164 = ssub.s32 128, 128
          %165 = vsyncadd %s159, %s164
          %s166 = smul.addr %s16, 128
          %s167 = scalar_lea.hbm %s0, %s166
          %s169 = sshll.u32 %s162, 4
          %s170 = int_to_ptr.vmem [resolvable:$true] %s169
          %172 = dma.hbm_to_vmem [thread:$0]  %s167, 128, %s170, %s159
        $region28: #{tpu_custom_call.1} parent=23 // pred_fallthru
          _
      $region24: #{tpu_custom_call.1} parent=5 // pred_fallthru
        _
      %p173 = scmp.le.s32.totalorder 1, %s16
      %p174 = scmp.lt.s32.totalorder %s16, 3
      %p175 = pnand %p173, %p174
      %p176 = pneg %p175
      // Predicated region
      $region29: #{tpu_custom_call.1} parent=5 // pred_check
        _
      $region30: #{tpu_custom_call.1} parent=5 // pred_check_branch
        %178 = sbr.rel (%p175) target = $region32
      $region31: #{tpu_custom_call.1} parent=5 // pred_region
        %s179 = ssub.s32 %s16, 1
        %s180 = sand.u32 %s29, 1
        %s181 = scalar_lea.sflag [#allocation3], %s180
        %s182 = sand.u32 %s29, 1
        %s183 = smul.addr %s182, 8
        %s184 = scalar_lea.vmem [#allocation2], %s183
        // Predicated region
        $region33: #{tpu_custom_call.1} parent=31 // pred_check
          %p185 = pneg %p42
        $region34: #{tpu_custom_call.1} parent=31 // pred_check_branch
          %187 = sbr.rel (%p185) target = $region36
        $region35: #{tpu_custom_call.1} parent=31 // pred_region
          %188 = dma.done %s181, 128
        $region36: #{tpu_custom_call.1} parent=31 // pred_fallthru
          _
        // Predicated region
        $region37: #{tpu_custom_call.1} parent=31 // pred_check
          %p189 = pneg %p63
        $region38: #{tpu_custom_call.1} parent=31 // pred_check_branch
          %191 = sbr.rel (%p189) target = $region40
        $region39: #{tpu_custom_call.1} parent=31 // pred_region
          %192 = dma.done [#allocation6], 2048
        $region40: #{tpu_custom_call.1} parent=31 // pred_fallthru
          _
        // Predicated region
        $region41: #{tpu_custom_call.1} parent=31 // pred_check
          %p193 = pneg %p84
        $region42: #{tpu_custom_call.1} parent=31 // pred_check_branch
          %195 = sbr.rel (%p193) target = $region44
        $region43: #{tpu_custom_call.1} parent=31 // pred_region
          %196 = dma.done [#allocation6], 4096
        $region44: #{tpu_custom_call.1} parent=31 // pred_fallthru
          _
        %s197 = sand.u32 %s29, 1
        %s198 = scalar_lea.sflag [#allocation3], %s197
        %s199 = sand.u32 %s29, 1
        %s200 = smul.addr %s199, 8
        %s201 = scalar_lea.vmem [#allocation2], %s200
        %p202 = pneg %p42
        %p203 = pneg %p39
        %p204 = pneg %p63
        %p205 = pneg %p60
        %p206 = pneg %p84
        %p207 = pneg %p81
        %p208 = pneg %p110
        %p209 = pneg %p107
        %s210 = sand.u32 %s97, 1
        %s211 = scalar_lea.sflag [#allocation4], %s210
        %s212 = sand.u32 %s97, 1
        %s213 = smul.addr %s212, 8
        %s214 = scalar_lea.vmem [#allocation8], %s213
        %v216 = vld [vmem:[%s184] sm:$0xff]
        %v217 = vmul.f32 %v216, 2.0
        %v218 = vpack.c.bf16 %v217, %v217
        %v219 = vunpack.c.l.bf16 %v218
        %v220 = vld [vmem:[#allocation7] sm:$0xf]
        %v221 = vld [vmem:[#allocation7 + $0x4] sm:$0xf]
        %v222 = vld [vmem:[#allocation7 + $0x8] sm:$0xf]
        %v223 = vld [vmem:[#allocation7 + $0xc] sm:$0xf]
        %v224 = vld [vmem:[#allocation7 + $0x10] sm:$0xf]
        %v225 = vld [vmem:[#allocation7 + $0x14] sm:$0xf]
        %v226 = vld [vmem:[#allocation7 + $0x18] sm:$0xf]
        %v227 = vld [vmem:[#allocation7 + $0x1c] sm:$0xf]
        %v228 = vld [vmem:[#allocation7 + $0x20] sm:$0xf]
        %v229 = vld [vmem:[#allocation7 + $0x24] sm:$0xf]
        %v230 = vld [vmem:[#allocation7 + $0x28] sm:$0xf]
        %v231 = vld [vmem:[#allocation7 + $0x2c] sm:$0xf]
        %v232 = vld [vmem:[#allocation7 + $0x30] sm:$0xf]
        %v233 = vld [vmem:[#allocation7 + $0x34] sm:$0xf]
        %v234 = vld [vmem:[#allocation7 + $0x38] sm:$0xf]
        %v235 = vld [vmem:[#allocation7 + $0x3c] sm:$0xf]
        %v252 = vunpack.c.l.b16 %v220
        %v253 = vunpack.c.l.b16 %v221
        %v254 = vunpack.c.l.b16 %v222
        %v255 = vunpack.c.l.b16 %v223
        %v256 = vunpack.c.l.b16 %v224
        %v257 = vunpack.c.l.b16 %v225
        %v258 = vunpack.c.l.b16 %v226
        %v259 = vunpack.c.l.b16 %v227
        %v260 = vunpack.c.l.b16 %v228
        %v261 = vunpack.c.l.b16 %v229
        %v262 = vunpack.c.l.b16 %v230
        %v263 = vunpack.c.l.b16 %v231
        %v264 = vunpack.c.l.b16 %v232
        %v265 = vunpack.c.l.b16 %v233
        %v266 = vunpack.c.l.b16 %v234
        %v267 = vunpack.c.l.b16 %v235
        %v268 = vpack.c.b16 %v253, %v252
        %v269 = vpack.c.b16 %v255, %v254
        %v270 = vpack.c.b16 %v257, %v256
        %v271 = vpack.c.b16 %v259, %v258
        %v272 = vpack.c.b16 %v261, %v260
        %v273 = vpack.c.b16 %v263, %v262
        %v274 = vpack.c.b16 %v265, %v264
        %v275 = vpack.c.b16 %v267, %v266
        %284 = vmatprep.subr.bf16.mxu0 0
        %285 = vmatpush1.bf16.msra.mxu0 %v268
        %286 = vmatprep.subr.bf16.mxu0 0
        %287 = vmatpush1.bf16.msra.mxu0 %v269
        %288 = vmatprep.subr.bf16.mxu0 0
        %289 = vmatpush1.bf16.msra.mxu0 %v270
        %290 = vmatprep.subr.bf16.mxu0 0
        %291 = vmatpush1.bf16.msra.mxu0 %v271
        %292 = vmatprep.subr.bf16.mxu0 0
        %293 = vmatpush1.bf16.msra.mxu0 %v272
        %294 = vmatprep.subr.bf16.mxu0 0
        %295 = vmatpush1.bf16.msra.mxu0 %v273
        %296 = vmatprep.subr.bf16.mxu0 0
        %297 = vmatpush1.bf16.msra.mxu0 %v274
        %298 = vmatprep.subr.bf16.mxu0 0
        %299 = vmatpush1.bf16.msra.mxu0 %v275
        %300 = vmatprep.subr.bf16.mxu0 0
        %301 = vmatpush1.bf16.msra.mxu0 0
        %302 = vmatprep.subr.bf16.mxu0 0
        %303 = vmatpush1.bf16.msra.mxu0 0
        %304 = vmatprep.subr.bf16.mxu0 0
        %305 = vmatpush1.bf16.msra.mxu0 0
        %306 = vmatprep.subr.bf16.mxu0 0
        %307 = vmatpush1.bf16.msra.mxu0 0
        %308 = vmatprep.subr.bf16.mxu0 0
        %309 = vmatpush1.bf16.msra.mxu0 0
        %310 = vmatprep.subr.bf16.mxu0 0
        %311 = vmatpush1.bf16.msra.mxu0 0
        %312 = vmatprep.subr.bf16.mxu0 0
        %313 = vmatpush1.bf16.msra.mxu0 0
        %314 = vmatprep.subr.bf16.mxu0 0
        %315 = vmatpush1.bf16.msra.mxu0 0
        %316 = vmatprep.mubr.bf16.mxu0 0
        %317 = vmatmul.mubr.bf16.gmra.mrb[0].mxu0 %v218
        %v318 = vpop.f32.mrb[0].mxu0
        %v319 = vadd.f32 0.0, %v318
        %v320 = vpop.f32.mrb[0].mxu0
        %v321 = vpop.f32.mrb[0].mxu0
        %v322 = vpop.f32.mrb[0].mxu0
        %323 = vdwg.mxu0
        %v324 = vmax.f32 %v219, %v319
        %v325 = vpack.c.bf16 %v324, %v324
        %s326 = scalar_lea.vmem [#allocation7], 64
        %v327 = vld [vmem:[%s326] sm:$0xf]
        %v328 = vld [vmem:[%s326 + $0x4] sm:$0xf]
        %v329 = vld [vmem:[%s326 + $0x8] sm:$0xf]
        %v330 = vld [vmem:[%s326 + $0xc] sm:$0xf]
        %v331 = vld [vmem:[%s326 + $0x10] sm:$0xf]
        %v332 = vld [vmem:[%s326 + $0x14] sm:$0xf]
        %v333 = vld [vmem:[%s326 + $0x18] sm:$0xf]
        %v334 = vld [vmem:[%s326 + $0x1c] sm:$0xf]
        %v335 = vld [vmem:[%s326 + $0x20] sm:$0xf]
        %v336 = vld [vmem:[%s326 + $0x24] sm:$0xf]
        %v337 = vld [vmem:[%s326 + $0x28] sm:$0xf]
        %v338 = vld [vmem:[%s326 + $0x2c] sm:$0xf]
        %v339 = vld [vmem:[%s326 + $0x30] sm:$0xf]
        %v340 = vld [vmem:[%s326 + $0x34] sm:$0xf]
        %v341 = vld [vmem:[%s326 + $0x38] sm:$0xf]
        %v342 = vld [vmem:[%s326 + $0x3c] sm:$0xf]
        %v359 = vunpack.c.l.b16 %v327
        %v360 = vunpack.c.l.b16 %v328
        %v361 = vunpack.c.l.b16 %v329
        %v362 = vunpack.c.l.b16 %v330
        %v363 = vunpack.c.l.b16 %v331
        %v364 = vunpack.c.l.b16 %v332
        %v365 = vunpack.c.l.b16 %v333
        %v366 = vunpack.c.l.b16 %v334
        %v367 = vunpack.c.l.b16 %v335
        %v368 = vunpack.c.l.b16 %v336
        %v369 = vunpack.c.l.b16 %v337
        %v370 = vunpack.c.l.b16 %v338
        %v371 = vunpack.c.l.b16 %v339
        %v372 = vunpack.c.l.b16 %v340
        %v373 = vunpack.c.l.b16 %v341
        %v374 = vunpack.c.l.b16 %v342
        %v375 = vpack.c.b16 %v360, %v359
        %v376 = vpack.c.b16 %v362, %v361
        %v377 = vpack.c.b16 %v364, %v363
        %v378 = vpack.c.b16 %v366, %v365
        %v379 = vpack.c.b16 %v368, %v367
        %v380 = vpack.c.b16 %v370, %v369
        %v381 = vpack.c.b16 %v372, %v371
        %v382 = vpack.c.b16 %v374, %v373
        %391 = vmatprep.subr.bf16.mxu0 0
        %392 = vmatpush1.bf16.msra.mxu0 %v375
        %393 = vmatprep.subr.bf16.mxu0 0
        %394 = vmatpush1.bf16.msra.mxu0 %v376
        %395 = vmatprep.subr.bf16.mxu0 0
        %396 = vmatpush1.bf16.msra.mxu0 %v377
        %397 = vmatprep.subr.bf16.mxu0 0
        %398 = vmatpush1.bf16.msra.mxu0 %v378
        %399 = vmatprep.subr.bf16.mxu0 0
        %400 = vmatpush1.bf16.msra.mxu0 %v379
        %401 = vmatprep.subr.bf16.mxu0 0
        %402 = vmatpush1.bf16.msra.mxu0 %v380
        %403 = vmatprep.subr.bf16.mxu0 0
        %404 = vmatpush1.bf16.msra.mxu0 %v381
        %405 = vmatprep.subr.bf16.mxu0 0
        %406 = vmatpush1.bf16.msra.mxu0 %v382
        %407 = vmatprep.subr.bf16.mxu0 0
        %408 = vmatpush1.bf16.msra.mxu0 0
        %409 = vmatprep.subr.bf16.mxu0 0
        %410 = vmatpush1.bf16.msra.mxu0 0
        %411 = vmatprep.subr.bf16.mxu0 0
        %412 = vmatpush1.bf16.msra.mxu0 0
        %413 = vmatprep.subr.bf16.mxu0 0
        %414 = vmatpush1.bf16.msra.mxu0 0
        %415 = vmatprep.subr.bf16.mxu0 0
        %416 = vmatpush1.bf16.msra.mxu0 0
        %417 = vmatprep.subr.bf16.mxu0 0
        %418 = vmatpush1.bf16.msra.mxu0 0
        %419 = vmatprep.subr.bf16.mxu0 0
        %420 = vmatpush1.bf16.msra.mxu0 0
        %421 = vmatprep.subr.bf16.mxu0 0
        %422 = vmatpush1.bf16.msra.mxu0 0
        %423 = vmatprep.mubr.bf16.mxu0 0
        %424 = vmatmul.mubr.bf16.gmra.mrb[0].mxu0 %v325
        %v425 = vpop.f32.mrb[0].mxu0
        %v426 = vadd.f32 0.0, %v425
        %v427 = vpop.f32.mrb[0].mxu0
        %v428 = vpop.f32.mrb[0].mxu0
        %v429 = vpop.f32.mrb[0].mxu0
        %430 = vdwg.mxu0
        %v431 = vmax.f32 %v324, %v426
        %v432 = vpack.c.bf16 %v431, %v431
        %s433 = scalar_lea.vmem [#allocation7], 128
        %v434 = vld [vmem:[%s433] sm:$0xf]
        %v435 = vld [vmem:[%s433 + $0x4] sm:$0xf]
        %v436 = vld [vmem:[%s433 + $0x8] sm:$0xf]
        %v437 = vld [vmem:[%s433 + $0xc] sm:$0xf]
        %v438 = vld [vmem:[%s433 + $0x10] sm:$0xf]
        %v439 = vld [vmem:[%s433 + $0x14] sm:$0xf]
        %v440 = vld [vmem:[%s433 + $0x18] sm:$0xf]
        %v441 = vld [vmem:[%s433 + $0x1c] sm:$0xf]
        %v442 = vld [vmem:[%s433 + $0x20] sm:$0xf]
        %v443 = vld [vmem:[%s433 + $0x24] sm:$0xf]
        %v444 = vld [vmem:[%s433 + $0x28] sm:$0xf]
        %v445 = vld [vmem:[%s433 + $0x2c] sm:$0xf]
        %v446 = vld [vmem:[%s433 + $0x30] sm:$0xf]
        %v447 = vld [vmem:[%s433 + $0x34] sm:$0xf]
        %v448 = vld [vmem:[%s433 + $0x38] sm:$0xf]
        %v449 = vld [vmem:[%s433 + $0x3c] sm:$0xf]
        %v466 = vunpack.c.l.b16 %v434
        %v467 = vunpack.c.l.b16 %v435
        %v468 = vunpack.c.l.b16 %v436
        %v469 = vunpack.c.l.b16 %v437
        %v470 = vunpack.c.l.b16 %v438
        %v471 = vunpack.c.l.b16 %v439
        %v472 = vunpack.c.l.b16 %v440
        %v473 = vunpack.c.l.b16 %v441
        %v474 = vunpack.c.l.b16 %v442
        %v475 = vunpack.c.l.b16 %v443
        %v476 = vunpack.c.l.b16 %v444
        %v477 = vunpack.c.l.b16 %v445
        %v478 = vunpack.c.l.b16 %v446
        %v479 = vunpack.c.l.b16 %v447
        %v480 = vunpack.c.l.b16 %v448
        %v481 = vunpack.c.l.b16 %v449
        %v482 = vpack.c.b16 %v467, %v466
        %v483 = vpack.c.b16 %v469, %v468
        %v484 = vpack.c.b16 %v471, %v470
        %v485 = vpack.c.b16 %v473, %v472
        %v486 = vpack.c.b16 %v475, %v474
        %v487 = vpack.c.b16 %v477, %v476
        %v488 = vpack.c.b16 %v479, %v478
        %v489 = vpack.c.b16 %v481, %v480
        %498 = vmatprep.subr.bf16.mxu0 0
        %499 = vmatpush1.bf16.msra.mxu0 %v482
        %500 = vmatprep.subr.bf16.mxu0 0
        %501 = vmatpush1.bf16.msra.mxu0 %v483
        %502 = vmatprep.subr.bf16.mxu0 0
        %503 = vmatpush1.bf16.msra.mxu0 %v484
        %504 = vmatprep.subr.bf16.mxu0 0
        %505 = vmatpush1.bf16.msra.mxu0 %v485
        %506 = vmatprep.subr.bf16.mxu0 0
        %507 = vmatpush1.bf16.msra.mxu0 %v486
        %508 = vmatprep.subr.bf16.mxu0 0
        %509 = vmatpush1.bf16.msra.mxu0 %v487
        %510 = vmatprep.subr.bf16.mxu0 0
        %511 = vmatpush1.bf16.msra.mxu0 %v488
        %512 = vmatprep.subr.bf16.mxu0 0
        %513 = vmatpush1.bf16.msra.mxu0 %v489
        %514 = vmatprep.subr.bf16.mxu0 0
        %515 = vmatpush1.bf16.msra.mxu0 0
        %516 = vmatprep.subr.bf16.mxu0 0
        %517 = vmatpush1.bf16.msra.mxu0 0
        %518 = vmatprep.subr.bf16.mxu0 0
        %519 = vmatpush1.bf16.msra.mxu0 0
        %520 = vmatprep.subr.bf16.mxu0 0
        %521 = vmatpush1.bf16.msra.mxu0 0
        %522 = vmatprep.subr.bf16.mxu0 0
        %523 = vmatpush1.bf16.msra.mxu0 0
        %524 = vmatprep.subr.bf16.mxu0 0
        %525 = vmatpush1.bf16.msra.mxu0 0
        %526 = vmatprep.subr.bf16.mxu0 0
        %527 = vmatpush1.bf16.msra.mxu0 0
        %528 = vmatprep.subr.bf16.mxu0 0
        %529 = vmatpush1.bf16.msra.mxu0 0
        %530 = vmatprep.mubr.bf16.mxu0 0
        %531 = vmatmul.mubr.bf16.gmra.mrb[0].mxu0 %v432
        %v532 = vpop.f32.mrb[0].mxu0
        %v533 = vadd.f32 0.0, %v532
        %v534 = vpop.f32.mrb[0].mxu0
        %v535 = vpop.f32.mrb[0].mxu0
        %v536 = vpop.f32.mrb[0].mxu0
        %537 = vdwg.mxu0
        %v538 = vmax.f32 %v431, %v533
        %v539 = vpack.c.bf16 %v538, %v538
        %s540 = scalar_lea.vmem [#allocation7], 192
        %v541 = vld [vmem:[%s540] sm:$0xf]
        %v542 = vld [vmem:[%s540 + $0x4] sm:$0xf]
        %v543 = vld [vmem:[%s540 + $0x8] sm:$0xf]
        %v544 = vld [vmem:[%s540 + $0xc] sm:$0xf]
        %v545 = vld [vmem:[%s540 + $0x10] sm:$0xf]
        %v546 = vld [vmem:[%s540 + $0x14] sm:$0xf]
        %v547 = vld [vmem:[%s540 + $0x18] sm:$0xf]
        %v548 = vld [vmem:[%s540 + $0x1c] sm:$0xf]
        %v549 = vld [vmem:[%s540 + $0x20] sm:$0xf]
        %v550 = vld [vmem:[%s540 + $0x24] sm:$0xf]
        %v551 = vld [vmem:[%s540 + $0x28] sm:$0xf]
        %v552 = vld [vmem:[%s540 + $0x2c] sm:$0xf]
        %v553 = vld [vmem:[%s540 + $0x30] sm:$0xf]
        %v554 = vld [vmem:[%s540 + $0x34] sm:$0xf]
        %v555 = vld [vmem:[%s540 + $0x38] sm:$0xf]
        %v556 = vld [vmem:[%s540 + $0x3c] sm:$0xf]
        %v573 = vunpack.c.l.b16 %v541
        %v574 = vunpack.c.l.b16 %v542
        %v575 = vunpack.c.l.b16 %v543
        %v576 = vunpack.c.l.b16 %v544
        %v577 = vunpack.c.l.b16 %v545
        %v578 = vunpack.c.l.b16 %v546
        %v579 = vunpack.c.l.b16 %v547
        %v580 = vunpack.c.l.b16 %v548
        %v581 = vunpack.c.l.b16 %v549
        %v582 = vunpack.c.l.b16 %v550
        %v583 = vunpack.c.l.b16 %v551
        %v584 = vunpack.c.l.b16 %v552
        %v585 = vunpack.c.l.b16 %v553
        %v586 = vunpack.c.l.b16 %v554
        %v587 = vunpack.c.l.b16 %v555
        %v588 = vunpack.c.l.b16 %v556
        %v589 = vpack.c.b16 %v574, %v573
        %v590 = vpack.c.b16 %v576, %v575
        %v591 = vpack.c.b16 %v578, %v577
        %v592 = vpack.c.b16 %v580, %v579
        %v593 = vpack.c.b16 %v582, %v581
        %v594 = vpack.c.b16 %v584, %v583
        %v595 = vpack.c.b16 %v586, %v585
        %v596 = vpack.c.b16 %v588, %v587
        %605 = vmatprep.subr.bf16.mxu0 0
        %606 = vmatpush1.bf16.msra.mxu0 %v589
        %607 = vmatprep.subr.bf16.mxu0 0
        %608 = vmatpush1.bf16.msra.mxu0 %v590
        %609 = vmatprep.subr.bf16.mxu0 0
        %610 = vmatpush1.bf16.msra.mxu0 %v591
        %611 = vmatprep.subr.bf16.mxu0 0
        %612 = vmatpush1.bf16.msra.mxu0 %v592
        %613 = vmatprep.subr.bf16.mxu0 0
        %614 = vmatpush1.bf16.msra.mxu0 %v593
        %615 = vmatprep.subr.bf16.mxu0 0
        %616 = vmatpush1.bf16.msra.mxu0 %v594
        %617 = vmatprep.subr.bf16.mxu0 0
        %618 = vmatpush1.bf16.msra.mxu0 %v595
        %619 = vmatprep.subr.bf16.mxu0 0
        %620 = vmatpush1.bf16.msra.mxu0 %v596
        %621 = vmatprep.subr.bf16.mxu0 0
        %622 = vmatpush1.bf16.msra.mxu0 0
        %623 = vmatprep.subr.bf16.mxu0 0
        %624 = vmatpush1.bf16.msra.mxu0 0
        %625 = vmatprep.subr.bf16.mxu0 0
        %626 = vmatpush1.bf16.msra.mxu0 0
        %627 = vmatprep.subr.bf16.mxu0 0
        %628 = vmatpush1.bf16.msra.mxu0 0
        %629 = vmatprep.subr.bf16.mxu0 0
        %630 = vmatpush1.bf16.msra.mxu0 0
        %631 = vmatprep.subr.bf16.mxu0 0
        %632 = vmatpush1.bf16.msra.mxu0 0
        %633 = vmatprep.subr.bf16.mxu0 0
        %634 = vmatpush1.bf16.msra.mxu0 0
        %635 = vmatprep.subr.bf16.mxu0 0
        %636 = vmatpush1.bf16.msra.mxu0 0
        %637 = vmatprep.mubr.bf16.mxu0 0
        %638 = vmatmul.mubr.bf16.gmra.mrb[0].mxu0 %v539
        %v639 = vpop.f32.mrb[0].mxu0
        %v640 = vadd.f32 0.0, %v639
        %v641 = vpop.f32.mrb[0].mxu0
        %v642 = vpop.f32.mrb[0].mxu0
        %v643 = vpop.f32.mrb[0].mxu0
        %644 = vdwg.mxu0
        %v645 = vmax.f32 %v538, %v640
        %v646 = vsub.f32 %v217, %v645
        %v647 = vmul.f32 %v646, 1.442695
        %v648 = vpow.pop %v647
        %v649 = vld [vmem:[#allocation5] sm:$0xff]
        %v650 = vld [vmem:[#allocation5 + $0x8] sm:$0xff]
        %v651 = vld [vmem:[#allocation5 + $0x10] sm:$0xff]
        %v652 = vld [vmem:[#allocation5 + $0x18] sm:$0xff]
        %v653 = vld [vmem:[#allocation5 + $0x20] sm:$0xff]
        %v654 = vld [vmem:[#allocation5 + $0x28] sm:$0xff]
        %v655 = vld [vmem:[#allocation5 + $0x30] sm:$0xff]
        %v656 = vld [vmem:[#allocation5 + $0x38] sm:$0xff]
        %v657 = vld [vmem:[#allocation5 + $0x40] sm:$0xff]
        %v658 = vld [vmem:[#allocation5 + $0x48] sm:$0xff]
        %v659 = vld [vmem:[#allocation5 + $0x50] sm:$0xff]
        %v660 = vld [vmem:[#allocation5 + $0x58] sm:$0xff]
        %v661 = vld [vmem:[#allocation5 + $0x60] sm:$0xff]
        %v662 = vld [vmem:[#allocation5 + $0x68] sm:$0xff]
        %v663 = vld [vmem:[#allocation5 + $0x70] sm:$0xff]
        %v664 = vld [vmem:[#allocation5 + $0x78] sm:$0xff]
        %665 = vmatprep.subr.mxu0 0.0
        %v666 = vand.u32 %v649, 4294901760
        %667 = vmatpush1.msra.mxu0 %v666
        %668 = vmatprep.subr.mxu0 0.0
        %v669 = vand.u32 %v650, 4294901760
        %670 = vmatpush1.msra.mxu0 %v669
        %671 = vmatprep.subr.mxu0 0.0
        %v672 = vand.u32 %v651, 4294901760
        %673 = vmatpush1.msra.mxu0 %v672
        %674 = vmatprep.subr.mxu0 0.0
        %v675 = vand.u32 %v652, 4294901760
        %676 = vmatpush1.msra.mxu0 %v675
        %677 = vmatprep.subr.mxu0 0.0
        %v678 = vand.u32 %v653, 4294901760
        %679 = vmatpush1.msra.mxu0 %v678
        %680 = vmatprep.subr.mxu0 0.0
        %v681 = vand.u32 %v654, 4294901760
        %682 = vmatpush1.msra.mxu0 %v681
        %683 = vmatprep.subr.mxu0 0.0
        %v684 = vand.u32 %v655, 4294901760
        %685 = vmatpush1.msra.mxu0 %v684
        %686 = vmatprep.subr.mxu0 0.0
        %v687 = vand.u32 %v656, 4294901760
        %688 = vmatpush1.msra.mxu0 %v687
        %689 = vmatprep.subr.mxu0 0.0
        %v690 = vand.u32 %v657, 4294901760
        %691 = vmatpush1.msra.mxu0 %v690
        %692 = vmatprep.subr.mxu0 0.0
        %v693 = vand.u32 %v658, 4294901760
        %694 = vmatpush1.msra.mxu0 %v693
        %695 = vmatprep.subr.mxu0 0.0
        %v696 = vand.u32 %v659, 4294901760
        %697 = vmatpush1.msra.mxu0 %v696
        %698 = vmatprep.subr.mxu0 0.0
        %v699 = vand.u32 %v660, 4294901760
        %700 = vmatpush1.msra.mxu0 %v699
        %701 = vmatprep.subr.mxu0 0.0
        %v702 = vand.u32 %v661, 4294901760
        %703 = vmatpush1.msra.mxu0 %v702
        %704 = vmatprep.subr.mxu0 0.0
        %v705 = vand.u32 %v662, 4294901760
        %706 = vmatpush1.msra.mxu0 %v705
        %707 = vmatprep.subr.mxu0 0.0
        %v708 = vand.u32 %v663, 4294901760
        %709 = vmatpush1.msra.mxu0 %v708
        %710 = vmatprep.subr.mxu0 0.0
        %v711 = vand.u32 %v664, 4294901760
        %712 = vmatpush1.msra.mxu0 %v711
        %713 = vmatprep.subr.mxu0 0.0
        %714 = vmatpush1.msra.mxu0 0.0
        %715 = vmatprep.subr.mxu0 0.0
        %716 = vmatpush1.msra.mxu0 0.0
        %717 = vmatprep.subr.mxu0 0.0
        %718 = vmatpush1.msra.mxu0 0.0
        %719 = vmatprep.subr.mxu0 0.0
        %720 = vmatpush1.msra.mxu0 0.0
        %721 = vmatprep.subr.mxu0 0.0
        %722 = vmatpush1.msra.mxu0 0.0
        %723 = vmatprep.subr.mxu0 0.0
        %724 = vmatpush1.msra.mxu0 0.0
        %725 = vmatprep.subr.mxu0 0.0
        %726 = vmatpush1.msra.mxu0 0.0
        %727 = vmatprep.subr.mxu0 0.0
        %728 = vmatpush1.msra.mxu0 0.0
        %729 = vmatprep.subr.mxu0 0.0
        %730 = vmatpush1.msra.mxu0 0.0
        %731 = vmatprep.subr.mxu0 0.0
        %732 = vmatpush1.msra.mxu0 0.0
        %733 = vmatprep.subr.mxu0 0.0
        %734 = vmatpush1.msra.mxu0 0.0
        %735 = vmatprep.subr.mxu0 0.0
        %736 = vmatpush1.msra.mxu0 0.0
        %737 = vmatprep.subr.mxu0 0.0
        %738 = vmatpush1.msra.mxu0 0.0
        %739 = vmatprep.subr.mxu0 0.0
        %740 = vmatpush1.msra.mxu0 0.0
        %741 = vmatprep.subr.mxu0 0.0
        %742 = vmatpush1.msra.mxu0 0.0
        %743 = vmatprep.subr.mxu0 0.0
        %744 = vmatpush1.msra.mxu0 0.0
        %745 = vmatprep.mubr.f32.mxu0 0.0
        %v746 = vand.u32 %v648, 4294901760
        %v747 = vsub.f32 %v648, %v746
        %v748 = vand.u32 %v747, 4294901760
        %v749 = vsub.f32 %v747, %v748
        %v750 = vand.u32 %v749, 4294901760
        %751 = vmatmul.mubr.f32.gmra.mrb[0].mxu0 %v750
        %v752 = vpop.f32.mrb[0].mxu0
        %v753 = vadd.f32 0.0, %v752
        %v754 = vpop.f32.mrb[0].mxu0
        %755 = vdwg.mxu0
        %756 = vmatprep.subr.mxu0 0.0
        %v757 = vand.u32 %v649, 4294901760
        %v758 = vsub.f32 %v649, %v757
        %v759 = vand.u32 %v758, 4294901760
        %v760 = vsub.f32 %v758, %v759
        %v761 = vand.u32 %v760, 4294901760
        %762 = vmatpush1.msra.mxu0 %v761
        %763 = vmatprep.subr.mxu0 0.0
        %v764 = vand.u32 %v650, 4294901760
        %v765 = vsub.f32 %v650, %v764
        %v766 = vand.u32 %v765, 4294901760
        %v767 = vsub.f32 %v765, %v766
        %v768 = vand.u32 %v767, 4294901760
        %769 = vmatpush1.msra.mxu0 %v768
        %770 = vmatprep.subr.mxu0 0.0
        %v771 = vand.u32 %v651, 4294901760
        %v772 = vsub.f32 %v651, %v771
        %v773 = vand.u32 %v772, 4294901760
        %v774 = vsub.f32 %v772, %v773
        %v775 = vand.u32 %v774, 4294901760
        %776 = vmatpush1.msra.mxu0 %v775
        %777 = vmatprep.subr.mxu0 0.0
        %v778 = vand.u32 %v652, 4294901760
        %v779 = vsub.f32 %v652, %v778
        %v780 = vand.u32 %v779, 4294901760
        %v781 = vsub.f32 %v779, %v780
        %v782 = vand.u32 %v781, 4294901760
        %783 = vmatpush1.msra.mxu0 %v782
        %784 = vmatprep.subr.mxu0 0.0
        %v785 = vand.u32 %v653, 4294901760
        %v786 = vsub.f32 %v653, %v785
        %v787 = vand.u32 %v786, 4294901760
        %v788 = vsub.f32 %v786, %v787
        %v789 = vand.u32 %v788, 4294901760
        %790 = vmatpush1.msra.mxu0 %v789
        %791 = vmatprep.subr.mxu0 0.0
        %v792 = vand.u32 %v654, 4294901760
        %v793 = vsub.f32 %v654, %v792
        %v794 = vand.u32 %v793, 4294901760
        %v795 = vsub.f32 %v793, %v794
        %v796 = vand.u32 %v795, 4294901760
        %797 = vmatpush1.msra.mxu0 %v796
        %798 = vmatprep.subr.mxu0 0.0
        %v799 = vand.u32 %v655, 4294901760
        %v800 = vsub.f32 %v655, %v799
        %v801 = vand.u32 %v800, 4294901760
        %v802 = vsub.f32 %v800, %v801
        %v803 = vand.u32 %v802, 4294901760
        %804 = vmatpush1.msra.mxu0 %v803
        %805 = vmatprep.subr.mxu0 0.0
        %v806 = vand.u32 %v656, 4294901760
        %v807 = vsub.f32 %v656, %v806
        %v808 = vand.u32 %v807, 4294901760
        %v809 = vsub.f32 %v807, %v808
        %v810 = vand.u32 %v809, 4294901760
        %811 = vmatpush1.msra.mxu0 %v810
        %812 = vmatprep.subr.mxu0 0.0
        %v813 = vand.u32 %v657, 4294901760
        %v814 = vsub.f32 %v657, %v813
        %v815 = vand.u32 %v814, 4294901760
        %v816 = vsub.f32 %v814, %v815
        %v817 = vand.u32 %v816, 4294901760
        %818 = vmatpush1.msra.mxu0 %v817
        %819 = vmatprep.subr.mxu0 0.0
        %v820 = vand.u32 %v658, 4294901760
        %v821 = vsub.f32 %v658, %v820
        %v822 = vand.u32 %v821, 4294901760
        %v823 = vsub.f32 %v821, %v822
        %v824 = vand.u32 %v823, 4294901760
        %825 = vmatpush1.msra.mxu0 %v824
        %826 = vmatprep.subr.mxu0 0.0
        %v827 = vand.u32 %v659, 4294901760
        %v828 = vsub.f32 %v659, %v827
        %v829 = vand.u32 %v828, 4294901760
        %v830 = vsub.f32 %v828, %v829
        %v831 = vand.u32 %v830, 4294901760
        %832 = vmatpush1.msra.mxu0 %v831
        %833 = vmatprep.subr.mxu0 0.0
        %v834 = vand.u32 %v660, 4294901760
        %v835 = vsub.f32 %v660, %v834
        %v836 = vand.u32 %v835, 4294901760
        %v837 = vsub.f32 %v835, %v836
        %v838 = vand.u32 %v837, 4294901760
        %839 = vmatpush1.msra.mxu0 %v838
        %840 = vmatprep.subr.mxu0 0.0
        %v841 = vand.u32 %v661, 4294901760
        %v842 = vsub.f32 %v661, %v841
        %v843 = vand.u32 %v842, 4294901760
        %v844 = vsub.f32 %v842, %v843
        %v845 = vand.u32 %v844, 4294901760
        %846 = vmatpush1.msra.mxu0 %v845
        %847 = vmatprep.subr.mxu0 0.0
        %v848 = vand.u32 %v662, 4294901760
        %v849 = vsub.f32 %v662, %v848
        %v850 = vand.u32 %v849, 4294901760
        %v851 = vsub.f32 %v849, %v850
        %v852 = vand.u32 %v851, 4294901760
        %853 = vmatpush1.msra.mxu0 %v852
        %854 = vmatprep.subr.mxu0 0.0
        %v855 = vand.u32 %v663, 4294901760
        %v856 = vsub.f32 %v663, %v855
        %v857 = vand.u32 %v856, 4294901760
        %v858 = vsub.f32 %v856, %v857
        %v859 = vand.u32 %v858, 4294901760
        %860 = vmatpush1.msra.mxu0 %v859
        %861 = vmatprep.subr.mxu0 0.0
        %v862 = vand.u32 %v664, 4294901760
        %v863 = vsub.f32 %v664, %v862
        %v864 = vand.u32 %v863, 4294901760
        %v865 = vsub.f32 %v863, %v864
        %v866 = vand.u32 %v865, 4294901760
        %867 = vmatpush1.msra.mxu0 %v866
        %868 = vmatprep.subr.mxu0 0.0
        %869 = vmatpush1.msra.mxu0 0.0
        %870 = vmatprep.subr.mxu0 0.0
        %871 = vmatpush1.msra.mxu0 0.0
        %872 = vmatprep.subr.mxu0 0.0
        %873 = vmatpush1.msra.mxu0 0.0
        %874 = vmatprep.subr.mxu0 0.0
        %875 = vmatpush1.msra.mxu0 0.0
        %876 = vmatprep.subr.mxu0 0.0
        %877 = vmatpush1.msra.mxu0 0.0
        %878 = vmatprep.subr.mxu0 0.0
        %879 = vmatpush1.msra.mxu0 0.0
        %880 = vmatprep.subr.mxu0 0.0
        %881 = vmatpush1.msra.mxu0 0.0
        %882 = vmatprep.subr.mxu0 0.0
        %883 = vmatpush1.msra.mxu0 0.0
        %884 = vmatprep.subr.mxu0 0.0
        %885 = vmatpush1.msra.mxu0 0.0
        %886 = vmatprep.subr.mxu0 0.0
        %887 = vmatpush1.msra.mxu0 0.0
        %888 = vmatprep.subr.mxu0 0.0
        %889 = vmatpush1.msra.mxu0 0.0
        %890 = vmatprep.subr.mxu0 0.0
        %891 = vmatpush1.msra.mxu0 0.0
        %892 = vmatprep.subr.mxu0 0.0
        %893 = vmatpush1.msra.mxu0 0.0
        %894 = vmatprep.subr.mxu0 0.0
        %895 = vmatpush1.msra.mxu0 0.0
        %896 = vmatprep.subr.mxu0 0.0
        %897 = vmatpush1.msra.mxu0 0.0
        %898 = vmatprep.subr.mxu0 0.0
        %899 = vmatpush1.msra.mxu0 0.0
        %900 = vmatprep.mubr.f32.mxu0 0.0
        %v901 = vand.u32 %v648, 4294901760
        %902 = vmatmul.mubr.f32.gmra.mrb[0].mxu0 %v901
        %v903 = vpop.f32.mrb[0].mxu0
        %v904 = vadd.f32 %v753, %v903
        %v905 = vpop.f32.mrb[0].mxu0
        %906 = vdwg.mxu0
        %907 = vmatprep.subr.mxu0 0.0
        %v908 = vand.u32 %v649, 4294901760
        %v909 = vsub.f32 %v649, %v908
        %910 = vmatpush1.msra.mxu0 %v909
        %911 = vmatprep.subr.mxu0 0.0
        %v912 = vand.u32 %v650, 4294901760
        %v913 = vsub.f32 %v650, %v912
        %914 = vmatpush1.msra.mxu0 %v913
        %915 = vmatprep.subr.mxu0 0.0
        %v916 = vand.u32 %v651, 4294901760
        %v917 = vsub.f32 %v651, %v916
        %918 = vmatpush1.msra.mxu0 %v917
        %919 = vmatprep.subr.mxu0 0.0
        %v920 = vand.u32 %v652, 4294901760
        %v921 = vsub.f32 %v652, %v920
        %922 = vmatpush1.msra.mxu0 %v921
        %923 = vmatprep.subr.mxu0 0.0
        %v924 = vand.u32 %v653, 4294901760
        %v925 = vsub.f32 %v653, %v924
        %926 = vmatpush1.msra.mxu0 %v925
        %927 = vmatprep.subr.mxu0 0.0
        %v928 = vand.u32 %v654, 4294901760
        %v929 = vsub.f32 %v654, %v928
        %930 = vmatpush1.msra.mxu0 %v929
        %931 = vmatprep.subr.mxu0 0.0
        %v932 = vand.u32 %v655, 4294901760
        %v933 = vsub.f32 %v655, %v932
        %934 = vmatpush1.msra.mxu0 %v933
        %935 = vmatprep.subr.mxu0 0.0
        %v936 = vand.u32 %v656, 4294901760
        %v937 = vsub.f32 %v656, %v936
        %938 = vmatpush1.msra.mxu0 %v937
        %939 = vmatprep.subr.mxu0 0.0
        %v940 = vand.u32 %v657, 4294901760
        %v941 = vsub.f32 %v657, %v940
        %942 = vmatpush1.msra.mxu0 %v941
        %943 = vmatprep.subr.mxu0 0.0
        %v944 = vand.u32 %v658, 4294901760
        %v945 = vsub.f32 %v658, %v944
        %946 = vmatpush1.msra.mxu0 %v945
        %947 = vmatprep.subr.mxu0 0.0
        %v948 = vand.u32 %v659, 4294901760
        %v949 = vsub.f32 %v659, %v948
        %950 = vmatpush1.msra.mxu0 %v949
        %951 = vmatprep.subr.mxu0 0.0
        %v952 = vand.u32 %v660, 4294901760
        %v953 = vsub.f32 %v660, %v952
        %954 = vmatpush1.msra.mxu0 %v953
        %955 = vmatprep.subr.mxu0 0.0
        %v956 = vand.u32 %v661, 4294901760
        %v957 = vsub.f32 %v661, %v956
        %958 = vmatpush1.msra.mxu0 %v957
        %959 = vmatprep.subr.mxu0 0.0
        %v960 = vand.u32 %v662, 4294901760
        %v961 = vsub.f32 %v662, %v960
        %962 = vmatpush1.msra.mxu0 %v961
        %963 = vmatprep.subr.mxu0 0.0
        %v964 = vand.u32 %v663, 4294901760
        %v965 = vsub.f32 %v663, %v964
        %966 = vmatpush1.msra.mxu0 %v965
        %967 = vmatprep.subr.mxu0 0.0
        %v968 = vand.u32 %v664, 4294901760
        %v969 = vsub.f32 %v664, %v968
        %970 = vmatpush1.msra.mxu0 %v969
        %971 = vmatprep.subr.mxu0 0.0
        %972 = vmatpush1.msra.mxu0 0.0
        %973 = vmatprep.subr.mxu0 0.0
        %974 = vmatpush1.msra.mxu0 0.0
        %975 = vmatprep.subr.mxu0 0.0
        %976 = vmatpush1.msra.mxu0 0.0
        %977 = vmatprep.subr.mxu0 0.0
        %978 = vmatpush1.msra.mxu0 0.0
        %979 = vmatprep.subr.mxu0 0.0
        %980 = vmatpush1.msra.mxu0 0.0
        %981 = vmatprep.subr.mxu0 0.0
        %982 = vmatpush1.msra.mxu0 0.0
        %983 = vmatprep.subr.mxu0 0.0
        %984 = vmatpush1.msra.mxu0 0.0
        %985 = vmatprep.subr.mxu0 0.0
        %986 = vmatpush1.msra.mxu0 0.0
        %987 = vmatprep.subr.mxu0 0.0
        %988 = vmatpush1.msra.mxu0 0.0
        %989 = vmatprep.subr.mxu0 0.0
        %990 = vmatpush1.msra.mxu0 0.0
        %991 = vmatprep.subr.mxu0 0.0
        %992 = vmatpush1.msra.mxu0 0.0
        %993 = vmatprep.subr.mxu0 0.0
        %994 = vmatpush1.msra.mxu0 0.0
        %995 = vmatprep.subr.mxu0 0.0
        %996 = vmatpush1.msra.mxu0 0.0
        %997 = vmatprep.subr.mxu0 0.0
        %998 = vmatpush1.msra.mxu0 0.0
        %999 = vmatprep.subr.mxu0 0.0
        %1000 = vmatpush1.msra.mxu0 0.0
        %1001 = vmatprep.subr.mxu0 0.0
        %1002 = vmatpush1.msra.mxu0 0.0
        %1003 = vmatprep.mubr.f32.mxu0 0.0
        %v1004 = vand.u32 %v648, 4294901760
        %v1005 = vsub.f32 %v648, %v1004
        %1006 = vmatmul.mubr.f32.gmra.mrb[0].mxu0 %v1005
        %v1007 = vpop.f32.mrb[0].mxu0
        %v1008 = vadd.f32 %v904, %v1007
        %v1009 = vpop.f32.mrb[0].mxu0
        %1010 = vdwg.mxu0
        %1011 = vmatprep.subr.mxu0 0.0
        %v1012 = vand.u32 %v649, 4294901760
        %1013 = vmatpush1.msra.mxu0 %v1012
        %1014 = vmatprep.subr.mxu0 0.0
        %v1015 = vand.u32 %v650, 4294901760
        %1016 = vmatpush1.msra.mxu0 %v1015
        %1017 = vmatprep.subr.mxu0 0.0
        %v1018 = vand.u32 %v651, 4294901760
        %1019 = vmatpush1.msra.mxu0 %v1018
        %1020 = vmatprep.subr.mxu0 0.0
        %v1021 = vand.u32 %v652, 4294901760
        %1022 = vmatpush1.msra.mxu0 %v1021
        %1023 = vmatprep.subr.mxu0 0.0
        %v1024 = vand.u32 %v653, 4294901760
        %1025 = vmatpush1.msra.mxu0 %v1024
        %1026 = vmatprep.subr.mxu0 0.0
        %v1027 = vand.u32 %v654, 4294901760
        %1028 = vmatpush1.msra.mxu0 %v1027
        %1029 = vmatprep.subr.mxu0 0.0
        %v1030 = vand.u32 %v655, 4294901760
        %1031 = vmatpush1.msra.mxu0 %v1030
        %1032 = vmatprep.subr.mxu0 0.0
        %v1033 = vand.u32 %v656, 4294901760
        %1034 = vmatpush1.msra.mxu0 %v1033
        %1035 = vmatprep.subr.mxu0 0.0
        %v1036 = vand.u32 %v657, 4294901760
        %1037 = vmatpush1.msra.mxu0 %v1036
        %1038 = vmatprep.subr.mxu0 0.0
        %v1039 = vand.u32 %v658, 4294901760
        %1040 = vmatpush1.msra.mxu0 %v1039
        %1041 = vmatprep.subr.mxu0 0.0
        %v1042 = vand.u32 %v659, 4294901760
        %1043 = vmatpush1.msra.mxu0 %v1042
        %1044 = vmatprep.subr.mxu0 0.0
        %v1045 = vand.u32 %v660, 4294901760
        %1046 = vmatpush1.msra.mxu0 %v1045
        %1047 = vmatprep.subr.mxu0 0.0
        %v1048 = vand.u32 %v661, 4294901760
        %1049 = vmatpush1.msra.mxu0 %v1048
        %1050 = vmatprep.subr.mxu0 0.0
        %v1051 = vand.u32 %v662, 4294901760
        %1052 = vmatpush1.msra.mxu0 %v1051
        %1053 = vmatprep.subr.mxu0 0.0
        %v1054 = vand.u32 %v663, 4294901760
        %1055 = vmatpush1.msra.mxu0 %v1054
        %1056 = vmatprep.subr.mxu0 0.0
        %v1057 = vand.u32 %v664, 4294901760
        %1058 = vmatpush1.msra.mxu0 %v1057
        %1059 = vmatprep.subr.mxu0 0.0
        %1060 = vmatpush1.msra.mxu0 0.0
        %1061 = vmatprep.subr.mxu0 0.0
        %1062 = vmatpush1.msra.mxu0 0.0
        %1063 = vmatprep.subr.mxu0 0.0
        %1064 = vmatpush1.msra.mxu0 0.0
        %1065 = vmatprep.subr.mxu0 0.0
        %1066 = vmatpush1.msra.mxu0 0.0
        %1067 = vmatprep.subr.mxu0 0.0
        %1068 = vmatpush1.msra.mxu0 0.0
        %1069 = vmatprep.subr.mxu0 0.0
        %1070 = vmatpush1.msra.mxu0 0.0
        %1071 = vmatprep.subr.mxu0 0.0
        %1072 = vmatpush1.msra.mxu0 0.0
        %1073 = vmatprep.subr.mxu0 0.0
        %1074 = vmatpush1.msra.mxu0 0.0
        %1075 = vmatprep.subr.mxu0 0.0
        %1076 = vmatpush1.msra.mxu0 0.0
        %1077 = vmatprep.subr.mxu0 0.0
        %1078 = vmatpush1.msra.mxu0 0.0
        %1079 = vmatprep.subr.mxu0 0.0
        %1080 = vmatpush1.msra.mxu0 0.0
        %1081 = vmatprep.subr.mxu0 0.0
        %1082 = vmatpush1.msra.mxu0 0.0
        %1083 = vmatprep.subr.mxu0 0.0
        %1084 = vmatpush1.msra.mxu0 0.0
        %1085 = vmatprep.subr.mxu0 0.0
        %1086 = vmatpush1.msra.mxu0 0.0
        %1087 = vmatprep.subr.mxu0 0.0
        %1088 = vmatpush1.msra.mxu0 0.0
        %1089 = vmatprep.subr.mxu0 0.0
        %1090 = vmatpush1.msra.mxu0 0.0
        %1091 = vmatprep.mubr.f32.mxu0 0.0
        %v1092 = vand.u32 %v648, 4294901760
        %v1093 = vsub.f32 %v648, %v1092
        %v1094 = vand.u32 %v1093, 4294901760
        %1095 = vmatmul.mubr.f32.gmra.mrb[0].mxu0 %v1094
        %v1096 = vpop.f32.mrb[0].mxu0
        %v1097 = vadd.f32 %v1008, %v1096
        %v1098 = vpop.f32.mrb[0].mxu0
        %1099 = vdwg.mxu0
        %1100 = vmatprep.subr.mxu0 0.0
        %v1101 = vand.u32 %v649, 4294901760
        %v1102 = vsub.f32 %v649, %v1101
        %v1103 = vand.u32 %v1102, 4294901760
        %1104 = vmatpush1.msra.mxu0 %v1103
        %1105 = vmatprep.subr.mxu0 0.0
        %v1106 = vand.u32 %v650, 4294901760
        %v1107 = vsub.f32 %v650, %v1106
        %v1108 = vand.u32 %v1107, 4294901760
        %1109 = vmatpush1.msra.mxu0 %v1108
        %1110 = vmatprep.subr.mxu0 0.0
        %v1111 = vand.u32 %v651, 4294901760
        %v1112 = vsub.f32 %v651, %v1111
        %v1113 = vand.u32 %v1112, 4294901760
        %1114 = vmatpush1.msra.mxu0 %v1113
        %1115 = vmatprep.subr.mxu0 0.0
        %v1116 = vand.u32 %v652, 4294901760
        %v1117 = vsub.f32 %v652, %v1116
        %v1118 = vand.u32 %v1117, 4294901760
        %1119 = vmatpush1.msra.mxu0 %v1118
        %1120 = vmatprep.subr.mxu0 0.0
        %v1121 = vand.u32 %v653, 4294901760
        %v1122 = vsub.f32 %v653, %v1121
        %v1123 = vand.u32 %v1122, 4294901760
        %1124 = vmatpush1.msra.mxu0 %v1123
        %1125 = vmatprep.subr.mxu0 0.0
        %v1126 = vand.u32 %v654, 4294901760
        %v1127 = vsub.f32 %v654, %v1126
        %v1128 = vand.u32 %v1127, 4294901760
        %1129 = vmatpush1.msra.mxu0 %v1128
        %1130 = vmatprep.subr.mxu0 0.0
        %v1131 = vand.u32 %v655, 4294901760
        %v1132 = vsub.f32 %v655, %v1131
        %v1133 = vand.u32 %v1132, 4294901760
        %1134 = vmatpush1.msra.mxu0 %v1133
        %1135 = vmatprep.subr.mxu0 0.0
        %v1136 = vand.u32 %v656, 4294901760
        %v1137 = vsub.f32 %v656, %v1136
        %v1138 = vand.u32 %v1137, 4294901760
        %1139 = vmatpush1.msra.mxu0 %v1138
        %1140 = vmatprep.subr.mxu0 0.0
        %v1141 = vand.u32 %v657, 4294901760
        %v1142 = vsub.f32 %v657, %v1141
        %v1143 = vand.u32 %v1142, 4294901760
        %1144 = vmatpush1.msra.mxu0 %v1143
        %1145 = vmatprep.subr.mxu0 0.0
        %v1146 = vand.u32 %v658, 4294901760
        %v1147 = vsub.f32 %v658, %v1146
        %v1148 = vand.u32 %v1147, 4294901760
        %1149 = vmatpush1.msra.mxu0 %v1148
        %1150 = vmatprep.subr.mxu0 0.0
        %v1151 = vand.u32 %v659, 4294901760
        %v1152 = vsub.f32 %v659, %v1151
        %v1153 = vand.u32 %v1152, 4294901760
        %1154 = vmatpush1.msra.mxu0 %v1153
        %1155 = vmatprep.subr.mxu0 0.0
        %v1156 = vand.u32 %v660, 4294901760
        %v1157 = vsub.f32 %v660, %v1156
        %v1158 = vand.u32 %v1157, 4294901760
        %1159 = vmatpush1.msra.mxu0 %v1158
        %1160 = vmatprep.subr.mxu0 0.0
        %v1161 = vand.u32 %v661, 4294901760
        %v1162 = vsub.f32 %v661, %v1161
        %v1163 = vand.u32 %v1162, 4294901760
        %1164 = vmatpush1.msra.mxu0 %v1163
        %1165 = vmatprep.subr.mxu0 0.0
        %v1166 = vand.u32 %v662, 4294901760
        %v1167 = vsub.f32 %v662, %v1166
        %v1168 = vand.u32 %v1167, 4294901760
        %1169 = vmatpush1.msra.mxu0 %v1168
        %1170 = vmatprep.subr.mxu0 0.0
        %v1171 = vand.u32 %v663, 4294901760
        %v1172 = vsub.f32 %v663, %v1171
        %v1173 = vand.u32 %v1172, 4294901760
        %1174 = vmatpush1.msra.mxu0 %v1173
        %1175 = vmatprep.subr.mxu0 0.0
        %v1176 = vand.u32 %v664, 4294901760
        %v1177 = vsub.f32 %v664, %v1176
        %v1178 = vand.u32 %v1177, 4294901760
        %1179 = vmatpush1.msra.mxu0 %v1178
        %1180 = vmatprep.subr.mxu0 0.0
        %1181 = vmatpush1.msra.mxu0 0.0
        %1182 = vmatprep.subr.mxu0 0.0
        %1183 = vmatpush1.msra.mxu0 0.0
        %1184 = vmatprep.subr.mxu0 0.0
        %1185 = vmatpush1.msra.mxu0 0.0
        %1186 = vmatprep.subr.mxu0 0.0
        %1187 = vmatpush1.msra.mxu0 0.0
        %1188 = vmatprep.subr.mxu0 0.0
        %1189 = vmatpush1.msra.mxu0 0.0
        %1190 = vmatprep.subr.mxu0 0.0
        %1191 = vmatpush1.msra.mxu0 0.0
        %1192 = vmatprep.subr.mxu0 0.0
        %1193 = vmatpush1.msra.mxu0 0.0
        %1194 = vmatprep.subr.mxu0 0.0
        %1195 = vmatpush1.msra.mxu0 0.0
        %1196 = vmatprep.subr.mxu0 0.0
        %1197 = vmatpush1.msra.mxu0 0.0
        %1198 = vmatprep.subr.mxu0 0.0
        %1199 = vmatpush1.msra.mxu0 0.0
        %1200 = vmatprep.subr.mxu0 0.0
        %1201 = vmatpush1.msra.mxu0 0.0
        %1202 = vmatprep.subr.mxu0 0.0
        %1203 = vmatpush1.msra.mxu0 0.0
        %1204 = vmatprep.subr.mxu0 0.0
        %1205 = vmatpush1.msra.mxu0 0.0
        %1206 = vmatprep.subr.mxu0 0.0
        %1207 = vmatpush1.msra.mxu0 0.0
        %1208 = vmatprep.subr.mxu0 0.0
        %1209 = vmatpush1.msra.mxu0 0.0
        %1210 = vmatprep.subr.mxu0 0.0
        %1211 = vmatpush1.msra.mxu0 0.0
        %1212 = vmatprep.mubr.f32.mxu0 0.0
        %v1213 = vand.u32 %v648, 4294901760
        %1214 = vmatmul.mubr.f32.gmra.mrb[0].mxu0 %v1213
        %v1215 = vpop.f32.mrb[0].mxu0
        %v1216 = vadd.f32 %v1097, %v1215
        %v1217 = vpop.f32.mrb[0].mxu0
        %1218 = vdwg.mxu0
        %1219 = vmatprep.subr.mxu0 0.0
        %v1220 = vand.u32 %v649, 4294901760
        %1221 = vmatpush1.msra.mxu0 %v1220
        %1222 = vmatprep.subr.mxu0 0.0
        %v1223 = vand.u32 %v650, 4294901760
        %1224 = vmatpush1.msra.mxu0 %v1223
        %1225 = vmatprep.subr.mxu0 0.0
        %v1226 = vand.u32 %v651, 4294901760
        %1227 = vmatpush1.msra.mxu0 %v1226
        %1228 = vmatprep.subr.mxu0 0.0
        %v1229 = vand.u32 %v652, 4294901760
        %1230 = vmatpush1.msra.mxu0 %v1229
        %1231 = vmatprep.subr.mxu0 0.0
        %v1232 = vand.u32 %v653, 4294901760
        %1233 = vmatpush1.msra.mxu0 %v1232
        %1234 = vmatprep.subr.mxu0 0.0
        %v1235 = vand.u32 %v654, 4294901760
        %1236 = vmatpush1.msra.mxu0 %v1235
        %1237 = vmatprep.subr.mxu0 0.0
        %v1238 = vand.u32 %v655, 4294901760
        %1239 = vmatpush1.msra.mxu0 %v1238
        %1240 = vmatprep.subr.mxu0 0.0
        %v1241 = vand.u32 %v656, 4294901760
        %1242 = vmatpush1.msra.mxu0 %v1241
        %1243 = vmatprep.subr.mxu0 0.0
        %v1244 = vand.u32 %v657, 4294901760
        %1245 = vmatpush1.msra.mxu0 %v1244
        %1246 = vmatprep.subr.mxu0 0.0
        %v1247 = vand.u32 %v658, 4294901760
        %1248 = vmatpush1.msra.mxu0 %v1247
        %1249 = vmatprep.subr.mxu0 0.0
        %v1250 = vand.u32 %v659, 4294901760
        %1251 = vmatpush1.msra.mxu0 %v1250
        %1252 = vmatprep.subr.mxu0 0.0
        %v1253 = vand.u32 %v660, 4294901760
        %1254 = vmatpush1.msra.mxu0 %v1253
        %1255 = vmatprep.subr.mxu0 0.0
        %v1256 = vand.u32 %v661, 4294901760
        %1257 = vmatpush1.msra.mxu0 %v1256
        %1258 = vmatprep.subr.mxu0 0.0
        %v1259 = vand.u32 %v662, 4294901760
        %1260 = vmatpush1.msra.mxu0 %v1259
        %1261 = vmatprep.subr.mxu0 0.0
        %v1262 = vand.u32 %v663, 4294901760
        %1263 = vmatpush1.msra.mxu0 %v1262
        %1264 = vmatprep.subr.mxu0 0.0
        %v1265 = vand.u32 %v664, 4294901760
        %1266 = vmatpush1.msra.mxu0 %v1265
        %1267 = vmatprep.subr.mxu0 0.0
        %1268 = vmatpush1.msra.mxu0 0.0
        %1269 = vmatprep.subr.mxu0 0.0
        %1270 = vmatpush1.msra.mxu0 0.0
        %1271 = vmatprep.subr.mxu0 0.0
        %1272 = vmatpush1.msra.mxu0 0.0
        %1273 = vmatprep.subr.mxu0 0.0
        %1274 = vmatpush1.msra.mxu0 0.0
        %1275 = vmatprep.subr.mxu0 0.0
        %1276 = vmatpush1.msra.mxu0 0.0
        %1277 = vmatprep.subr.mxu0 0.0
        %1278 = vmatpush1.msra.mxu0 0.0
        %1279 = vmatprep.subr.mxu0 0.0
        %1280 = vmatpush1.msra.mxu0 0.0
        %1281 = vmatprep.subr.mxu0 0.0
        %1282 = vmatpush1.msra.mxu0 0.0
        %1283 = vmatprep.subr.mxu0 0.0
        %1284 = vmatpush1.msra.mxu0 0.0
        %1285 = vmatprep.subr.mxu0 0.0
        %1286 = vmatpush1.msra.mxu0 0.0
        %1287 = vmatprep.subr.mxu0 0.0
        %1288 = vmatpush1.msra.mxu0 0.0
        %1289 = vmatprep.subr.mxu0 0.0
        %1290 = vmatpush1.msra.mxu0 0.0
        %1291 = vmatprep.subr.mxu0 0.0
        %1292 = vmatpush1.msra.mxu0 0.0
        %1293 = vmatprep.subr.mxu0 0.0
        %1294 = vmatpush1.msra.mxu0 0.0
        %1295 = vmatprep.subr.mxu0 0.0
        %1296 = vmatpush1.msra.mxu0 0.0
        %1297 = vmatprep.subr.mxu0 0.0
        %1298 = vmatpush1.msra.mxu0 0.0
        %1299 = vmatprep.mubr.f32.mxu0 0.0
        %v1300 = vand.u32 %v648, 4294901760
        %1301 = vmatmul.mubr.f32.gmra.mrb[0].mxu0 %v1300
        %v1302 = vpop.f32.mrb[0].mxu0
        %v1303 = vadd.f32 %v1216, %v1302
        %v1304 = vpop.f32.mrb[0].mxu0
        %1305 = vdwg.mxu0
        %v1306 = vrcp.pop %v1303
        %v1307 = vmul.f32 %v1303, %v1306
        %v1308 = vsub.f32 2.0, %v1307
        %v1309 = vmul.f32 %v1306, %v1308
        %v1310 = vmul.f32 %v648, %v1309
        %1311 = vst [vmem:[%s214] sm:$0xff] %v1310
        %s1312 = sand.u32 %s97, 1
        %s1313 = scalar_lea.sflag [#allocation4], %s1312
        %s1314 = sand.u32 %s97, 1
        %s1315 = smul.addr %s1314, 8
        %s1316 = scalar_lea.vmem [#allocation8], %s1315
        // Predicated region
        $region45: #{tpu_custom_call.1} parent=31 // pred_check
          %p1317 = pneg %p107
        $region46: #{tpu_custom_call.1} parent=31 // pred_check_branch
          %1319 = sbr.rel (%p1317) target = $region48
        $region47: #{tpu_custom_call.1} parent=31 // pred_region
          %s1321 = ssub.s32 128, 128
          %1322 = vsyncadd %s1313, %s1321
          %s1323 = smul.addr %s21, 128
          %s1324 = scalar_lea.hbm %s3, %s1323
          %s1326 = sshll.u32 %s1316, 4
          %s1327 = int_to_ptr.vmem [resolvable:$true] %s1326
          %1329 = dma.vmem_to_hbm [thread:$0]  %s1327, 128, %s1324, %s1313
        $region48: #{tpu_custom_call.1} parent=31 // pred_fallthru
          _
      $region32: #{tpu_custom_call.1} parent=5 // pred_fallthru
        _
      %p1330 = scmp.le.s32.totalorder 2, %s16
      // Predicated region
      $region49: #{tpu_custom_call.1} parent=5 // pred_check
        %p1331 = pneg %p1330
      $region50: #{tpu_custom_call.1} parent=5 // pred_check_branch
        %1333 = sbr.rel (%p1331) target = $region52
      $region51: #{tpu_custom_call.1} parent=5 // pred_region
        %s1334 = ssub.s32 %s16, 2
        // Predicated region
        $region53: #{tpu_custom_call.1} parent=51 // pred_check
          %p1335 = pneg %p113
        $region54: #{tpu_custom_call.1} parent=51 // pred_check_branch
          %1337 = sbr.rel (%p1335) target = $region56
        $region55: #{tpu_custom_call.1} parent=51 // pred_region
          %s1338 = sand.u32 %s98, 1
          %s1339 = scalar_lea.sflag [#allocation4], %s1338
          %s1340 = sand.u32 %s98, 1
          %s1341 = smul.addr %s1340, 8
          %s1342 = scalar_lea.vmem [#allocation8], %s1341
          %1343 = dma.done %s1339, 128
        $region56: #{tpu_custom_call.1} parent=51 // pred_fallthru
          _
      $region52: #{tpu_custom_call.1} parent=5 // pred_fallthru
        _
    $region6: #{tpu_custom_call.1} parent=1 // loop_footer
      %s20 = sadd.s32 1, %s16
    $region7: #{tpu_custom_call.1} parent=1 // loop_footer_branch
      %15 = sbr.rel target = $region3
    $region8: #{tpu_custom_call.1} parent=1 // loop_exit
      _
    %1344 = vsyncpa [#allocation3], 1
    %s1345 = scalar_lea.sflag [#allocation3], 1
    %1346 = vsyncpa %s1345, 1
    %1347 = vsyncpa [#allocation6], 1
    %1348 = vsyncpa [#allocation4], 1
    %s1349 = scalar_lea.sflag [#allocation4], 1
    %1350 = vsyncpa %s1349, 1

</llo_original>
